<compile_context>
chip_gen: v7x
topology: tpu7x:2x2x1
jax: 0.10.0
libtpu: 0.0.40
codegen_flags: <defaults>
</compile_context>

<pallas_src>
import functools

import jax
import jax.numpy as jnp
from jax import lax
from jax.experimental import pallas as pl
from jax.experimental.pallas import tpu as pltpu


def _conv1d_bank_kernel(x_ref, lens_ref, w_ref, b_ref, o_ref, *, T, C_in, TB,
                        compute_dtype):
    # x_ref   : VMEM (TB, T, C_in)      unpadded input tile (compute_dtype)
    # lens_ref: VMEM (TB, 1) int32      per-batch valid lengths
    # w_ref   : VMEM (4*C_in, D_pad)    fused conv weights (compute_dtype)
    # b_ref   : VMEM (1, D_pad) f32     fused bias (lane-padded with zeros)
    # o_ref   : VMEM (TB, D_pad) f32    per-batch pooled output
    d_pad = w_ref.shape[1]

    # Build the padded / im2col slab in f32 (safe layouts for the sublane
    # shifts), cast to compute dtype only for the MXU push.
    x = x_ref[...].astype(jnp.float32)                       # (TB, T, C_in)
    xp = jnp.concatenate(
        [x, jnp.zeros((TB, 3, C_in), jnp.float32)], axis=1)  # (TB, T+3, C_in)
    slab = jnp.concatenate(
        [xp[:, dk:dk + T, :] for dk in range(4)], axis=-1)   # (TB, T, 4*C_in)
    slab2 = slab.reshape(TB * T, 4 * C_in).astype(compute_dtype)

    # Single fused matmul: K = 4*C_in, M = TB*T, N = D_pad (lane dense).
    acc = jnp.dot(slab2, w_ref[...],
                  preferred_element_type=jnp.float32)        # (TB*T, D_pad)
    acc = acc.reshape(TB, T, d_pad)

    # Length mask (-inf so the max ignores invalid rows), then max over time.
    t_ids = lax.broadcasted_iota(jnp.int32, (TB, T, 1), 1)
    lens = lens_ref[...].reshape(TB, 1, 1)
    acc = jnp.where(t_ids < lens, acc, -jnp.inf)
    pooled = jnp.max(acc, axis=1)                            # (TB, D_pad)

    # Hoisted bias + ReLU on the pooled (TB, D_pad) result; the outer max with
    # 0 also restores 0 for fully-masked (mask_len == 0 / padded) batches.
    o_ref[...] = jnp.maximum(pooled + b_ref[...], 0.0).astype(o_ref.dtype)


def _choose_tb(B, T):
    """Batch-tile size: ~256 matmul rows per step, multiple of 8 sublanes."""
    tb = -(-256 // T)          # ceil(256 / T)
    tb = -(-tb // 8) * 8       # round up to a multiple of 8
    if tb >= B:
        return B               # single block: block dims equal full array dims
    return tb


def conv1d_forward(x, mask_len, w_big, b_big, *, compute_dtype=jnp.float32,
                   tb=None):
    """x: (B, T, C_in), mask_len: (B,) int, w_big: (4*C_in, D_out), b_big: (D_out,)."""
    B, T, C_in = x.shape
    D_out = w_big.shape[1]
    D_pad = -(-D_out // 128) * 128          # lane-dense output width
    if tb is None:
        tb = _choose_tb(B, T)
    B_pad = -(-B // tb) * tb

    # Inputs in compute dtype (bf16 halves HBM/VMEM traffic on v6e/v7x).
    x_c = x.astype(compute_dtype)
    lens = mask_len.astype(jnp.int32).reshape(B, 1)
    if B_pad != B:                          # pad batch; padded rows masked out
        x_c = jnp.concatenate(
            [x_c, jnp.zeros((B_pad - B, T, C_in), compute_dtype)], axis=0)
        lens = jnp.concatenate(
            [lens, jnp.zeros((B_pad - B, 1), jnp.int32)], axis=0)

    # Lane-pad the fused weight / bias to D_pad (zero columns, sliced off below).
    w_pad = jnp.zeros((4 * C_in, D_pad), compute_dtype)
    w_pad = w_pad.at[:, :D_out].set(w_big.astype(compute_dtype))
    b_pad = jnp.zeros((1, D_pad), jnp.float32)
    b_pad = b_pad.at[0, :D_out].set(b_big.astype(jnp.float32))

    kernel = functools.partial(_conv1d_bank_kernel, T=T, C_in=C_in, TB=tb,
                               compute_dtype=compute_dtype)
    out = pl.pallas_call(
        kernel,
        out_shape=jax.ShapeDtypeStruct((B_pad, D_pad), jnp.float32),
        grid=(B_pad // tb,),
        in_specs=[
            pl.BlockSpec((tb, T, C_in), lambda i: (i, 0, 0)),
            pl.BlockSpec((tb, 1), lambda i: (i, 0)),
            pl.BlockSpec((4 * C_in, D_pad), lambda i: (0, 0)),
            pl.BlockSpec((1, D_pad), lambda i: (0, 0)),
        ],
        out_specs=pl.BlockSpec((tb, D_pad), lambda i: (i, 0)),
        compiler_params=pltpu.CompilerParams(
            dimension_semantics=("parallel",)),
    )(x_c, lens, w_pad, b_pad)
    return out[:B, :D_out]


def init_params(key, n_dim, out_dim):
    """Deterministic synthetic init mimicking nn.Conv1d shapes: W_k (C_out4, C_in, k)."""
    c_out4 = out_dim // 4   # matches int(out_dim / 4) in the module
    weights, biases = [], []
    for k in range(1, 5):
        key, kw, kb = jax.random.split(key, 3)
        bound = 1.0 / jnp.sqrt(n_dim * k)
        weights.append(jax.random.uniform(kw, (c_out4, n_dim, k), jnp.float32,
                                          -bound, bound))
        biases.append(jax.random.uniform(kb, (c_out4,), jnp.float32, -bound, bound))
    return weights, biases


def fuse_params(weights, biases, n_dim):
    """Pack the 4 conv weights into a single (4*C_in, D_out) matmul weight.

    Channel order [k1 | k2 | k3 | k4] matches torch.cat in the forward.
    Note: out_dim not divisible by 4 silently drops channels (inherited from
    the PyTorch module's int(out_dim / 4)).
    """
    c_out4 = weights[0].shape[0]
    d_out = 4 * c_out4
    w_big = jnp.zeros((4 * n_dim, d_out), jnp.float32)
    for k in range(1, 5):
        wk = weights[k - 1]                       # (C_out4, C_in, k)
        for dk in range(k):
            w_big = w_big.at[dk * n_dim:(dk + 1) * n_dim,
                             (k - 1) * c_out4:k * c_out4].set(wk[:, :, dk].T)
    b_big = jnp.concatenate(biases)               # (D_out,)
    return w_big, b_big


def reference_forward(x, mask_len, weights, biases):
    """Pure-JAX reference reproducing the PyTorch forward exactly."""
    B, T, C = x.shape
    xp = jnp.concatenate([x, jnp.zeros((B, 3, C), x.dtype)], axis=1)
    outs = []
    for k in range(1, 5):
        wk, bk = weights[k - 1], biases[k - 1]
        o = jnp.zeros((B, T, wk.shape[0]), jnp.float32)
        for dk in range(k):
            o = o + jnp.einsum("btc,oc->bto", xp[:, dk:dk + T, :], wk[:, :, dk])
        outs.append(jax.nn.relu(o + bk))
    out = jnp.concatenate(outs, axis=-1)                       # (B, T, D_out)
    mask = (jnp.arange(T)[None, :] < mask_len[:, None])[:, :, None]
    out = jnp.where(mask, out, 0.0)
    return out.max(axis=1)


if __name__ == "__main__":
    # Small shapes consistent with the module: n_dim=32, out_dim=32 -> D_out=32.
    B, T, n_dim, out_dim = 2, 8, 32, 32
    key = jax.random.PRNGKey(0)
    key, kx = jax.random.split(key)
    x = jax.random.normal(kx, (B, T, n_dim), jnp.float32)
    mask_len = jnp.array([T, 5], dtype=jnp.int32)

    weights, biases = init_params(jax.random.PRNGKey(0), n_dim, out_dim)
    w_big, b_big = fuse_params(weights, biases, n_dim)

    ref = reference_forward(x, mask_len, weights, biases)

    # f32 path (exact check).
    out = jax.block_until_ready(conv1d_forward(x, mask_len, w_big, b_big))
    assert out.shape == (B, 4 * (out_dim // 4))
    assert jnp.allclose(out, ref, atol=1e-5, rtol=1e-5), "f32 mismatch vs reference"

    # bf16 compute path (v6e / v7x bf16 MXU fast path), relaxed tolerance.
    out_bf16 = jax.block_until_ready(
        conv1d_forward(x, mask_len, w_big, b_big, compute_dtype=jnp.bfloat16))
    assert jnp.allclose(out_bf16, ref, atol=5e-2, rtol=5e-2), "bf16 mismatch vs reference"

    print("KERNEL_OK")
</pallas_src>

<mosaic_0001>
module attributes {stable_mosaic.version = 11 : i64} {
  func.func @_conv1d_bank_kernel(%arg0: i32, %arg1: memref<2x8x32xf32, #tpu.memory_space<vmem>>, %arg2: memref<2x1xi32, #tpu.memory_space<vmem>>, %arg3: memref<128x128xf32, #tpu.memory_space<vmem>>, %arg4: memref<1x128xf32, #tpu.memory_space<vmem>>, %arg5: memref<2x128xf32, #tpu.memory_space<vmem>>) attributes {dimension_semantics = [#tpu.dimension_semantics<parallel>], iteration_bounds = array<i64: 1>, scalar_prefetch = 0 : i64, scratch_operands = 0 : i64, tpu.core_type = #tpu.core_type<tc>, window_params = [{transform_indices = @transform_0, window_bounds = array<i64: 2, 8, 32>}, {transform_indices = @transform_1, window_bounds = array<i64: 2, 1>}, {pipeline_mode = #tpu.pipeline_mode<synchronous>, transform_indices = @transform_2, window_bounds = array<i64: 128, 128>}, {pipeline_mode = #tpu.pipeline_mode<synchronous>, transform_indices = @transform_3, window_bounds = array<i64: 1, 128>}, {transform_indices = @transform_4, window_bounds = array<i64: 2, 128>}]} {
    %c0 = arith.constant 0 : index
    %c0_0 = arith.constant 0 : index
    %c0_1 = arith.constant 0 : index
    %0 = vector.load %arg1[%c0, %c0_0, %c0_1] : memref<2x8x32xf32, #tpu.memory_space<vmem>>, vector<2x8x32xf32>
    %cst = arith.constant 0.000000e+00 : f32
    %1 = vector.broadcast %cst : f32 to vector<2x3x32xf32>
    %2 = tpu.concatenate %0, %1 in 1 : vector<2x8x32xf32>, vector<2x3x32xf32> -> vector<2x11x32xf32>
    %3 = vector.extract_strided_slice %2 {offsets = [0, 0, 0], sizes = [2, 8, 32], strides = [1, 1, 1]} : vector<2x11x32xf32> to vector<2x8x32xf32>
    %4 = vector.extract_strided_slice %2 {offsets = [0, 1, 0], sizes = [2, 8, 32], strides = [1, 1, 1]} : vector<2x11x32xf32> to vector<2x8x32xf32>
    %5 = vector.extract_strided_slice %2 {offsets = [0, 2, 0], sizes = [2, 8, 32], strides = [1, 1, 1]} : vector<2x11x32xf32> to vector<2x8x32xf32>
    %6 = vector.extract_strided_slice %2 {offsets = [0, 3, 0], sizes = [2, 8, 32], strides = [1, 1, 1]} : vector<2x11x32xf32> to vector<2x8x32xf32>
    %7 = tpu.concatenate %3, %4, %5, %6 in 2 : vector<2x8x32xf32>, vector<2x8x32xf32>, vector<2x8x32xf32>, vector<2x8x32xf32> -> vector<2x8x128xf32>
    %8 = vector.shape_cast %7 : vector<2x8x128xf32> to vector<16x128xf32>
    %c0_2 = arith.constant 0 : index
    %c0_3 = arith.constant 0 : index
    %9 = vector.load %arg3[%c0_2, %c0_3] : memref<128x128xf32, #tpu.memory_space<vmem>>, vector<128x128xf32>
    %cst_4 = arith.constant dense<0.000000e+00> : vector<16x128xf32>
    %10 = tpu.matmul %8, %9, %cst_4 {dimension_numbers = #tpu.dot_dimension_numbers<[1], [0], [0], [1], [0, 0, 1, 1], [], []>} : vector<16x128xf32>, vector<128x128xf32>, vector<16x128xf32> -> vector<16x128xf32>
    %11 = vector.shape_cast %10 : vector<16x128xf32> to vector<2x8x128xf32>
    %12 = tpu.iota {dimensions = array<i32: 1>} : vector<2x8x1xi32>
    %c0_5 = arith.constant 0 : index
    %c0_6 = arith.constant 0 : index
    %13 = vector.load %arg2[%c0_5, %c0_6] : memref<2x1xi32, #tpu.memory_space<vmem>>, vector<2x1xi32>
    %14 = vector.shape_cast %13 : vector<2x1xi32> to vector<2x1x1xi32>
    %15 = vector.broadcast %14 : vector<2x1x1xi32> to vector<2x8x1xi32>
    %16 = arith.cmpi slt, %12, %15 : vector<2x8x1xi32>
    %cst_7 = arith.constant 0xFF800000 : f32
    %17 = vector.shape_cast %16 : vector<2x8x1xi1> to vector<2x8x1xi1>
    %18 = vector.broadcast %17 : vector<2x8x1xi1> to vector<2x8x128xi1>
    %19 = vector.broadcast %cst_7 : f32 to vector<2x8x128xf32>
    %20 = arith.select %18, %11, %19 : vector<2x8x128xi1>, vector<2x8x128xf32>
    %cst_8 = arith.constant dense<0xFF800000> : vector<2x128xf32>
    %21 = vector.multi_reduction <maximumf>, %20, %cst_8 [1] : vector<2x8x128xf32> to vector<2x128xf32>
    %c0_9 = arith.constant 0 : index
    %c0_10 = arith.constant 0 : index
    %22 = vector.load %arg4[%c0_9, %c0_10] : memref<1x128xf32, #tpu.memory_space<vmem>>, vector<1x128xf32>
    %23 = vector.broadcast %22 : vector<1x128xf32> to vector<2x128xf32>
    %24 = arith.addf %21, %23 : vector<2x128xf32>
    %cst_11 = arith.constant 0.000000e+00 : f32
    %25 = vector.broadcast %cst_11 : f32 to vector<2x128xf32>
    %26 = arith.maximumf %24, %25 : vector<2x128xf32>
    %c0_12 = arith.constant 0 : index
    %c0_13 = arith.constant 0 : index
    %27 = vector.load %arg5[%c0_12, %c0_13] : memref<2x128xf32, #tpu.memory_space<vmem>>, vector<2x128xf32>
    tpu.vector_store %arg5[%c0_12, %c0_13], %26 {strides = array<i32>} : memref<2x128xf32, #tpu.memory_space<vmem>>, vector<2x128xf32>,
    return
  }
  func.func @transform_0(%arg0: i32) -> (i32, i32, i32) {
    %c0_i32 = arith.constant 0 : i32
    %c0_i32_0 = arith.constant 0 : i32
    %c0_i32_1 = arith.constant 0 : i32
    return %arg0, %c0_i32, %c0_i32_0 : i32, i32, i32
  }
  func.func @transform_1(%arg0: i32) -> (i32, i32) {
    %c0_i32 = arith.constant 0 : i32
    %c0_i32_0 = arith.constant 0 : i32
    return %arg0, %c0_i32 : i32, i32
  }
  func.func @transform_2(%arg0: i32) -> (i32, i32) {
    %c0_i32 = arith.constant 0 : i32
    %c0_i32_0 = arith.constant 0 : i32
    %c0_i32_1 = arith.constant 0 : i32
    return %c0_i32, %c0_i32_0 : i32, i32
  }
  func.func @transform_3(%arg0: i32) -> (i32, i32) {
    %c0_i32 = arith.constant 0 : i32
    %c0_i32_0 = arith.constant 0 : i32
    %c0_i32_1 = arith.constant 0 : i32
    return %c0_i32, %c0_i32_0 : i32, i32
  }
  func.func @transform_4(%arg0: i32) -> (i32, i32) {
    %c0_i32 = arith.constant 0 : i32
    %c0_i32_0 = arith.constant 0 : i32
    return %arg0, %c0_i32 : i32, i32
  }
}

</mosaic_0001>

<llo_original>
// kernel: tpu_custom_call.1
$region0: #{tpu_custom_call.1}
  #allocation0 [shape = 'u32[]', space=smem, size = 0x4, offset = 0x4, fixed_abs, tag = 'smem constant byte address 0x4 - core index']
  #allocation1 [shape = 'u32[144,128]{1,0:T(1,128)}', space=vmem, size = 0x12000, scoped, tag = 'internal scratch']
  %s0 = inlined_call_operand.hbm [shape: f32[2,8,32], index: 0, kind: input, shape index: {}]
  %s1 = inlined_call_operand.vmem [shape: s32[2,1], index: 1, kind: input, shape index: {}]
  %s2 = inlined_call_operand.hbm [shape: f32[128,128], index: 2, kind: input, shape index: {}]
  %s3 = inlined_call_operand.vmem [shape: f32[1,128], index: 3, kind: input, shape index: {}]
  %s4 = inlined_call_operand.hbm [shape: f32[2,128], index: 4, kind: output, shape index: {}]
  %s5 = sld [smem:[#allocation0]]
  $region34: #{tpu_custom_call.1} parent=0
    _
  %s7 = ssub.s32 1, %s5
  %s8 = scalar_select 0, %s7, %s5
  $region1: #{tpu_custom_call.1} parent=0
    #allocation2 [shape = 'u8[8192]{0}', space=vmem, size = 0x2000, scoped, tag = 'input window, operand 0, single buffered']
    #allocation3 [shape = 's32[1]{0}', space=sflag, size = 0x4, scoped, tag = 'scoped memory for tpu_custom_call.1']
    #allocation4 [shape = 's32[1]{0}', space=sflag, size = 0x4, scoped, tag = 'scoped memory for tpu_custom_call.1']
    #allocation5 [shape = 'u8[65536]{0}', space=vmem, size = 0x10000, scoped, tag = 'input window, operand 2, single buffered']
    #allocation6 [shape = 's32[1]{0}', space=sflag, size = 0x4, scoped, tag = 'scoped memory for tpu_custom_call.1']
    #allocation7 [shape = 'u8[1024]{0}', space=vmem, size = 0x400, scoped, tag = 'output window, operand 0, single buffered']
    %9 = vsyncpa [#allocation3], 0
    %10 = vsyncpa [#allocation6], 0
    %11 = vsyncpa [#allocation4], 0
    // Predicated region
    $region2: #{tpu_custom_call.1} parent=1 // pred_check
      _
    $region3: #{tpu_custom_call.1} parent=1 // pred_check_branch
      %13 = sbr.rel (0) target = $region5
    $region4: #{tpu_custom_call.1} parent=1 // pred_region
      %s15 = ssub.s32 256, 256
      %16 = vsyncadd [#allocation3], %s15
      %s17 = sshll.u32 [#allocation2], 4
      %s18 = int_to_ptr.vmem [resolvable:$true] %s17
      %23 = dma.hbm_to_vmem [thread:$0]  %s0, 256, %s18, [#allocation3], 128, 128, 8
    $region5: #{tpu_custom_call.1} parent=1 // pred_fallthru
      _
    // Predicated region
    $region6: #{tpu_custom_call.1} parent=1 // pred_check
      _
    $region7: #{tpu_custom_call.1} parent=1 // pred_check_branch
      %25 = sbr.rel (0) target = $region9
    $region8: #{tpu_custom_call.1} parent=1 // pred_region
      _
    $region9: #{tpu_custom_call.1} parent=1 // pred_fallthru
      _
    // Predicated region
    $region10: #{tpu_custom_call.1} parent=1 // pred_check
      _
    $region11: #{tpu_custom_call.1} parent=1 // pred_check_branch
      %27 = sbr.rel (0) target = $region13
    $region12: #{tpu_custom_call.1} parent=1 // pred_region
      %s29 = ssub.s32 2048, 2048
      %30 = vsyncadd [#allocation6], %s29
      %s31 = sshll.u32 [#allocation5], 4
      %s32 = int_to_ptr.vmem [resolvable:$true] %s31
      %37 = dma.hbm_to_vmem [thread:$0]  %s2, 2048, %s32, [#allocation6], 128, 128, 8
    $region13: #{tpu_custom_call.1} parent=1 // pred_fallthru
      _
    // Predicated region
    $region14: #{tpu_custom_call.1} parent=1 // pred_check
      _
    $region15: #{tpu_custom_call.1} parent=1 // pred_check_branch
      %39 = sbr.rel (0) target = $region17
    $region16: #{tpu_custom_call.1} parent=1 // pred_region
      _
    $region17: #{tpu_custom_call.1} parent=1 // pred_fallthru
      _
    // Predicated region
    $region18: #{tpu_custom_call.1} parent=1 // pred_check
      _
    $region19: #{tpu_custom_call.1} parent=1 // pred_check_branch
      %41 = sbr.rel (0) target = $region21
    $region20: #{tpu_custom_call.1} parent=1 // pred_region
      %42 = dma.done [#allocation3], 256
    $region21: #{tpu_custom_call.1} parent=1 // pred_fallthru
      _
    // Predicated region
    $region22: #{tpu_custom_call.1} parent=1 // pred_check
      _
    $region23: #{tpu_custom_call.1} parent=1 // pred_check_branch
      %44 = sbr.rel (0) target = $region25
    $region24: #{tpu_custom_call.1} parent=1 // pred_region
      %45 = dma.done [#allocation6], 2048
    $region25: #{tpu_custom_call.1} parent=1 // pred_fallthru
      _
    %v46 = vld [vmem:[#allocation2] sm:$0xff]
    %v47 = vld [vmem:[#allocation2 + $0x8] sm:$0xff]
    %vm51 = vcmask 1046528
    %v52 = vrot.slane %v46, 1
    %v53 = vrot.slane 0.0, 1
    %v54 = vsel %vm51, %v52, %v53
    %v55 = vrot.slane %v47, 1
    %v56 = vsel %vm51, %v55, %v53
    %57 = vrot.lane.b32.xlu0 %v54, 32
    %v58 = vpop.permute.xlu0 %57
    %59 = vrot.lane.b32.xlu0 %v56, 32
    %v60 = vpop.permute.xlu0 %59
    %vm63 = vcmask 1045504
    %v64 = vrot.slane %v46, 2
    %v65 = vrot.slane 0.0, 2
    %v66 = vsel %vm63, %v64, %v65
    %v67 = vrot.slane %v47, 2
    %v68 = vsel %vm63, %v67, %v65
    %69 = vrot.lane.b32.xlu0 %v66, 64
    %v70 = vpop.permute.xlu0 %69
    %71 = vrot.lane.b32.xlu0 %v68, 64
    %v72 = vpop.permute.xlu0 %71
    %vm75 = vcmask 1044480
    %v76 = vrot.slane %v46, 3
    %v77 = vrot.slane 0.0, 3
    %v78 = vsel %vm75, %v76, %v77
    %v79 = vrot.slane %v47, 3
    %v80 = vsel %vm75, %v79, %v77
    %81 = vrot.lane.b32.xlu0 %v78, 96
    %v82 = vpop.permute.xlu0 %81
    %83 = vrot.lane.b32.xlu0 %v80, 96
    %v84 = vpop.permute.xlu0 %83
    %vm87 = vcmask 261120
    %v88 = vsel %vm87, %v46, %v58
    %v89 = vsel %vm87, %v47, %v60
    %vm90 = vcmask 523264
    %v91 = vsel %vm90, %v88, %v70
    %v92 = vsel %vm90, %v89, %v72
    %vm93 = vcmask 785408
    %v94 = vsel %vm93, %v91, %v82
    %v95 = vsel %vm93, %v92, %v84
    %v96 = vld [vmem:[#allocation5] sm:$0xff]
    %v97 = vld [vmem:[#allocation5 + $0x8] sm:$0xff]
    %v98 = vld [vmem:[#allocation5 + $0x10] sm:$0xff]
    %v99 = vld [vmem:[#allocation5 + $0x18] sm:$0xff]
    %v100 = vld [vmem:[#allocation5 + $0x20] sm:$0xff]
    %v101 = vld [vmem:[#allocation5 + $0x28] sm:$0xff]
    %v102 = vld [vmem:[#allocation5 + $0x30] sm:$0xff]
    %v103 = vld [vmem:[#allocation5 + $0x38] sm:$0xff]
    %v104 = vld [vmem:[#allocation5 + $0x40] sm:$0xff]
    %v105 = vld [vmem:[#allocation5 + $0x48] sm:$0xff]
    %v106 = vld [vmem:[#allocation5 + $0x50] sm:$0xff]
    %v107 = vld [vmem:[#allocation5 + $0x58] sm:$0xff]
    %v108 = vld [vmem:[#allocation5 + $0x60] sm:$0xff]
    %v109 = vld [vmem:[#allocation5 + $0x68] sm:$0xff]
    %v110 = vld [vmem:[#allocation5 + $0x70] sm:$0xff]
    %v111 = vld [vmem:[#allocation5 + $0x78] sm:$0xff]
    %112 = vmatprep.subr.mxu0 0.0
    %113 = vmatpush1.msra.mxu0 %v96
    %114 = vmatprep.subr.mxu0 0.0
    %115 = vmatpush1.msra.mxu0 %v97
    %116 = vmatprep.subr.mxu0 0.0
    %117 = vmatpush1.msra.mxu0 %v98
    %118 = vmatprep.subr.mxu0 0.0
    %119 = vmatpush1.msra.mxu0 %v99
    %120 = vmatprep.subr.mxu0 0.0
    %121 = vmatpush1.msra.mxu0 %v100
    %122 = vmatprep.subr.mxu0 0.0
    %123 = vmatpush1.msra.mxu0 %v101
    %124 = vmatprep.subr.mxu0 0.0
    %125 = vmatpush1.msra.mxu0 %v102
    %126 = vmatprep.subr.mxu0 0.0
    %127 = vmatpush1.msra.mxu0 %v103
    %128 = vmatprep.subr.mxu0 0.0
    %129 = vmatpush1.msra.mxu0 %v104
    %130 = vmatprep.subr.mxu0 0.0
    %131 = vmatpush1.msra.mxu0 %v105
    %132 = vmatprep.subr.mxu0 0.0
    %133 = vmatpush1.msra.mxu0 %v106
    %134 = vmatprep.subr.mxu0 0.0
    %135 = vmatpush1.msra.mxu0 %v107
    %136 = vmatprep.subr.mxu0 0.0
    %137 = vmatpush1.msra.mxu0 %v108
    %138 = vmatprep.subr.mxu0 0.0
    %139 = vmatpush1.msra.mxu0 %v109
    %140 = vmatprep.subr.mxu0 0.0
    %141 = vmatpush1.msra.mxu0 %v110
    %142 = vmatprep.subr.mxu0 0.0
    %143 = vmatpush1.msra.mxu0 %v111
    %144 = vmatprep.subr.mxu0 0.0
    %145 = vmatpush1.msra.mxu0 0.0
    %146 = vmatprep.subr.mxu0 0.0
    %147 = vmatpush1.msra.mxu0 0.0
    %148 = vmatprep.subr.mxu0 0.0
    %149 = vmatpush1.msra.mxu0 0.0
    %150 = vmatprep.subr.mxu0 0.0
    %151 = vmatpush1.msra.mxu0 0.0
    %152 = vmatprep.subr.mxu0 0.0
    %153 = vmatpush1.msra.mxu0 0.0
    %154 = vmatprep.subr.mxu0 0.0
    %155 = vmatpush1.msra.mxu0 0.0
    %156 = vmatprep.subr.mxu0 0.0
    %157 = vmatpush1.msra.mxu0 0.0
    %158 = vmatprep.subr.mxu0 0.0
    %159 = vmatpush1.msra.mxu0 0.0
    %160 = vmatprep.subr.mxu0 0.0
    %161 = vmatpush1.msra.mxu0 0.0
    %162 = vmatprep.subr.mxu0 0.0
    %163 = vmatpush1.msra.mxu0 0.0
    %164 = vmatprep.subr.mxu0 0.0
    %165 = vmatpush1.msra.mxu0 0.0
    %166 = vmatprep.subr.mxu0 0.0
    %167 = vmatpush1.msra.mxu0 0.0
    %168 = vmatprep.subr.mxu0 0.0
    %169 = vmatpush1.msra.mxu0 0.0
    %170 = vmatprep.subr.mxu0 0.0
    %171 = vmatpush1.msra.mxu0 0.0
    %172 = vmatprep.subr.mxu0 0.0
    %173 = vmatpush1.msra.mxu0 0.0
    %174 = vmatprep.subr.mxu0 0.0
    %175 = vmatpush1.msra.mxu0 0.0
    %176 = vmatprep.mubr.f32.mxu0 0.0
    %177 = vmatmul.mubr.f32.gmra.mrb[0].mxu0 %v94
    %v178 = vpop.f32.mrb[0].mxu0
    %v179 = vadd.f32 0.0, %v178
    %v180 = vpop.f32.mrb[0].mxu0
    %181 = vmatprep.mubr.f32.mxu0 0.0
    %182 = vmatmul.mubr.f32.gmra.mrb[0].mxu0 %v95
    %v183 = vpop.f32.mrb[0].mxu0
    %v184 = vadd.f32 0.0, %v183
    %v185 = vpop.f32.mrb[0].mxu0
    %186 = vdwg.mxu0
    %v187 = vlaneseq
    %v188 = vshrl.u32 %v187, 7
    %v189 = vld [vmem:[%s1] sm:$0x3]
    %v191 = vunpack.c.l.s4 1966171168
    %v192 = vunpack.c.0.s8 %v191
    %v193 = vlaneseq
    %v194 = vshrl.u32 %v193, 7
    %v195 = vsub.s32 %v192, %v194
    %v196 = vrot.slane %v189, %v195
    %v197 = vcombine.high %v196, %v196
    %v199 = vunpack.c.l.s4 1966171168
    %v200 = vunpack.c.0.s8 %v199
    %v201 = vlaneseq
    %v202 = vshrl.u32 %v201, 7
    %v203 = vsub.s32 %v200, %v202
    %v204 = vrot.slane %v196, %v203
    %v206 = vunpack.c.l.s4 1966171168
    %v207 = vunpack.c.0.s8 %v206
    %v208 = vlaneseq
    %v209 = vshrl.u32 %v208, 7
    %v210 = vsub.s32 %v207, %v209
    %v211 = vrot.slane %v197, %v210
    %v212 = vlaneseq
    %v213 = vshrl.u32 %v212, 7
    %v214 = vsub.s32 0, %v213
    %v215 = vrot.slane %v204, %v214
    %v216 = vlaneseq
    %v217 = vshrl.u32 %v216, 7
    %v218 = vsub.s32 0, %v217
    %v219 = vrot.slane %v211, %v218
    %vm220 = vcmp.lt.s32.totalorder %v188, %v215
    %vm221 = vcmp.lt.s32.totalorder %v188, %v219
    %v222 = vsel %vm220, 1, 0
    %v223 = vsel %vm221, 1, 0
    %224 = vset.pattern.permute.xlu0 0
    %225 = vperm.xlu0 %224, %v222
    %v226 = vpop.permute.xlu0 %225
    %227 = vset.pattern.permute.xlu0 0
    %228 = vperm.xlu0 %227, %v223
    %v229 = vpop.permute.xlu0 %228
    %vm230 = vcmp.eq.s32.totalorder %v226, 1
    %vm231 = vcmp.eq.s32.totalorder %v229, 1
    %v232 = vsel %vm230, %v179, -inf
    %v233 = vsel %vm231, %v184, -inf
    %v234 = vrot.slane %v232, 4
    %v235 = vmax.f32 %v232, %v234
    %v236 = vrot.slane %v235, 2
    %v237 = vmax.f32 %v235, %v236
    %v238 = vrot.slane %v237, 1
    %v239 = vmax.f32 %v237, %v238
    %v240 = vrot.slane %v233, 4
    %v241 = vmax.f32 %v233, %v240
    %v242 = vrot.slane %v241, 2
    %v243 = vmax.f32 %v241, %v242
    %v244 = vrot.slane %v243, 1
    %v245 = vmax.f32 %v243, %v244
    %v246 = vld [vmem:[%s3] sm:$0x1]
    %v248 = vlaneseq
    %v249 = vshrl.u32 %v248, 7
    %v250 = vsub.s32 0, %v249
    %v251 = vrot.slane %v246, %v250
    %v253 = vadd.f32 %v239, %v251
    %v254 = vadd.f32 %v245, %v251
    %v255 = vmax.f32 %v253, 0.0
    %v256 = vmax.f32 %v254, 0.0
    %v259 = vrot.slane %v256, 7
    %vm260 = vcmask 1041409
    %v261 = vsel %vm260, %v259, %v255
    %263 = vst [vmem:[#allocation7] sm:$0x3] %v261
    // Predicated region
    $region26: #{tpu_custom_call.1} parent=1 // pred_check
      _
    $region27: #{tpu_custom_call.1} parent=1 // pred_check_branch
      %265 = sbr.rel (0) target = $region29
    $region28: #{tpu_custom_call.1} parent=1 // pred_region
      %s267 = ssub.s32 32, 32
      %268 = vsyncadd [#allocation4], %s267
      %s270 = sshll.u32 [#allocation7], 4
      %s271 = int_to_ptr.vmem [resolvable:$true] %s270
      %273 = dma.vmem_to_hbm [thread:$0]  %s271, 32, %s4, [#allocation4]
    $region29: #{tpu_custom_call.1} parent=1 // pred_fallthru
      _
    // Predicated region
    $region30: #{tpu_custom_call.1} parent=1 // pred_check
      _
    $region31: #{tpu_custom_call.1} parent=1 // pred_check_branch
      %275 = sbr.rel (0) target = $region33
    $region32: #{tpu_custom_call.1} parent=1 // pred_region
      %276 = dma.done [#allocation4], 32
    $region33: #{tpu_custom_call.1} parent=1 // pred_fallthru
      _
    %277 = vsyncpa [#allocation3], 1
    %278 = vsyncpa [#allocation6], 1
    %279 = vsyncpa [#allocation4], 1

</llo_original>
